<compile_context>
chip_gen: v6e
topology: v6e:2x2x1
jax: 0.10.0
libtpu: 0.0.40
codegen_flags: <defaults>
</compile_context>

<pallas_src>
import jax
import jax.numpy as jnp
from jax import lax
from jax.experimental import pallas as pl
from jax.experimental.pallas import tpu as pltpu


def fake1d_attention_kernel(x_ref, a_ref,
                            w1_ref, b1_ref,
                            w2_ref, b2_ref,
                            w3_ref, b3_ref,
                            o_ref):
    # Weights are in PyTorch (out, in) layout; contract dim 1 of both operands
    # (i.e. x @ W.T) directly on the MXU -- no transpose ops anywhere.
    dn = (((1,), (1,)), ((), ()))

    # attn1 * x  (broadcast (1, F_in) row over the batch tile)
    x = x_ref[...] * a_ref[...]

    # fc1 + ReLU
    h = lax.dot_general(x, w1_ref[...], dn,
                        preferred_element_type=jnp.float32) + b1_ref[...]
    h = jnp.maximum(h, 0.0)

    # fc2 + ReLU
    h = lax.dot_general(h, w2_ref[...], dn,
                        preferred_element_type=jnp.float32) + b2_ref[...]
    h = jnp.maximum(h, 0.0)

    # fc3
    z = lax.dot_general(h, w3_ref[...], dn,
                        preferred_element_type=jnp.float32) + b3_ref[...]

    # softmax over dim 1 (feature axis), numerically stable.
    z = z - jnp.max(z, axis=1, keepdims=True)
    e = jnp.exp(z)
    inv = pl.reciprocal(jnp.sum(e, axis=1, keepdims=True), approx=True)
    o_ref[...] = (e * inv).astype(o_ref.dtype)


def fake1d_attention(x, attn1, w1, b1, w2, b2, w3, b3, *, block_b=128):
    """x: (B, F_in); weights in PyTorch layout (out, in); biases (out,)."""
    B, F_in = x.shape
    H1, H2, F_out = w1.shape[0], w2.shape[0], w3.shape[0]

    tb = min(block_b, B)
    grid = (pl.cdiv(B, tb),)

    # Weights / biases / attn1: constant block index -> stay resident in VMEM
    # across all grid steps (total ~10 KB at these shapes).
    def resident(shape):
        return pl.BlockSpec(shape, lambda i: (0, 0))

    in_specs = [
        pl.BlockSpec((tb, F_in), lambda i: (i, 0)),    # x   (batch-tiled)
        resident((1, F_in)),                           # attn1 row
        resident((H1, F_in)), resident((1, H1)),       # fc1 weight / bias
        resident((H2, H1)),   resident((1, H2)),       # fc2 weight / bias
        resident((F_out, H2)), resident((1, F_out)),   # fc3 weight / bias
    ]
    out_spec = pl.BlockSpec((tb, F_out), lambda i: (i, 0))

    return pl.pallas_call(
        fake1d_attention_kernel,
        out_shape=jax.ShapeDtypeStruct((B, F_out), x.dtype),
        grid=grid,
        in_specs=in_specs,
        out_specs=out_spec,
        compiler_params=pltpu.CompilerParams(
            dimension_semantics=("parallel",)),        # v7x: both TensorCores
    )(
        x,
        attn1.reshape(1, F_in),
        w1, b1.reshape(1, H1),
        w2, b2.reshape(1, H2),
        w3, b3.reshape(1, F_out),
    )


if __name__ == "__main__":
    # 128 rows per grid step -> 4 pipelined steps, MXU-height batch tiles.
    B, F_in, F_out = 512, 32, 16

    key = jax.random.PRNGKey(0)
    ks = jax.random.split(key, 8)
    x     = jax.random.normal(ks[0], (B, F_in), dtype=jnp.float32)
    attn1 = jax.random.normal(ks[1], (F_in,), dtype=jnp.float32)
    w1    = jax.random.normal(ks[2], (F_in, F_in), dtype=jnp.float32) * 0.1
    b1    = jax.random.normal(ks[3], (F_in,), dtype=jnp.float32) * 0.1
    w2    = jax.random.normal(ks[4], (F_in, F_in), dtype=jnp.float32) * 0.1
    b2    = jax.random.normal(ks[5], (F_in,), dtype=jnp.float32) * 0.1
    w3    = jax.random.normal(ks[6], (F_out, F_in), dtype=jnp.float32) * 0.1
    b3    = jax.random.normal(ks[7], (F_out,), dtype=jnp.float32) * 0.1

    out = fake1d_attention(x, attn1, w1, b1, w2, b2, w3, b3)
    out = jax.block_until_ready(out)

    # Pure-JAX reference check.
    def ref(x):
        y = attn1 * x
        y = jnp.maximum(y @ w1.T + b1, 0.0)
        y = jnp.maximum(y @ w2.T + b2, 0.0)
        y = y @ w3.T + b3
        return jax.nn.softmax(y, axis=1)

    expected = ref(x)
    assert out.shape == (B, F_out)
    # approx=True reciprocal in the softmax -> ~1e-3-level tolerance.
    assert jnp.allclose(out, expected, atol=3e-3, rtol=3e-3), "mismatch vs reference"
    assert jnp.allclose(jnp.sum(out, axis=1), 1.0, atol=3e-3), "softmax rows must sum to ~1"

    print("KERNEL_OK")
</pallas_src>

<mosaic_0001>
module attributes {stable_mosaic.version = 11 : i64} {
  func.func @fake1d_attention_kernel(%arg0: i32, %arg1: memref<128x32xf32, #tpu.memory_space<vmem>>, %arg2: memref<1x32xf32, #tpu.memory_space<vmem>>, %arg3: memref<32x32xf32, #tpu.memory_space<vmem>>, %arg4: memref<1x32xf32, #tpu.memory_space<vmem>>, %arg5: memref<32x32xf32, #tpu.memory_space<vmem>>, %arg6: memref<1x32xf32, #tpu.memory_space<vmem>>, %arg7: memref<16x32xf32, #tpu.memory_space<vmem>>, %arg8: memref<1x16xf32, #tpu.memory_space<vmem>>, %arg9: memref<128x16xf32, #tpu.memory_space<vmem>>) attributes {dimension_semantics = [#tpu.dimension_semantics<parallel>], iteration_bounds = array<i64: 4>, scalar_prefetch = 0 : i64, scratch_operands = 0 : i64, tpu.core_type = #tpu.core_type<tc>, window_params = [{transform_indices = @transform_0, window_bounds = array<i64: 128, 32>}, {pipeline_mode = #tpu.pipeline_mode<synchronous>, transform_indices = @transform_1, window_bounds = array<i64: 1, 32>}, {pipeline_mode = #tpu.pipeline_mode<synchronous>, transform_indices = @transform_2, window_bounds = array<i64: 32, 32>}, {pipeline_mode = #tpu.pipeline_mode<synchronous>, transform_indices = @transform_3, window_bounds = array<i64: 1, 32>}, {pipeline_mode = #tpu.pipeline_mode<synchronous>, transform_indices = @transform_4, window_bounds = array<i64: 32, 32>}, {pipeline_mode = #tpu.pipeline_mode<synchronous>, transform_indices = @transform_5, window_bounds = array<i64: 1, 32>}, {pipeline_mode = #tpu.pipeline_mode<synchronous>, transform_indices = @transform_6, window_bounds = array<i64: 16, 32>}, {pipeline_mode = #tpu.pipeline_mode<synchronous>, transform_indices = @transform_7, window_bounds = array<i64: 1, 16>}, {transform_indices = @transform_8, window_bounds = array<i64: 128, 16>}]} {
    %c0 = arith.constant 0 : index
    %c0_0 = arith.constant 0 : index
    %0 = vector.load %arg1[%c0, %c0_0] : memref<128x32xf32, #tpu.memory_space<vmem>>, vector<128x32xf32>
    %c0_1 = arith.constant 0 : index
    %c0_2 = arith.constant 0 : index
    %1 = vector.load %arg2[%c0_1, %c0_2] : memref<1x32xf32, #tpu.memory_space<vmem>>, vector<1x32xf32>
    %2 = vector.broadcast %1 : vector<1x32xf32> to vector<128x32xf32>
    %3 = arith.mulf %0, %2 : vector<128x32xf32>
    %c0_3 = arith.constant 0 : index
    %c0_4 = arith.constant 0 : index
    %4 = vector.load %arg3[%c0_3, %c0_4] : memref<32x32xf32, #tpu.memory_space<vmem>>, vector<32x32xf32>
    %cst = arith.constant dense<0.000000e+00> : vector<128x32xf32>
    %5 = tpu.matmul %3, %4, %cst {dimension_numbers = #tpu.dot_dimension_numbers<[1], [1], [0], [0], [0, 0, 1, 0], [], []>} : vector<128x32xf32>, vector<32x32xf32>, vector<128x32xf32> -> vector<128x32xf32>
    %c0_5 = arith.constant 0 : index
    %c0_6 = arith.constant 0 : index
    %6 = vector.load %arg4[%c0_5, %c0_6] : memref<1x32xf32, #tpu.memory_space<vmem>>, vector<1x32xf32>
    %7 = vector.broadcast %6 : vector<1x32xf32> to vector<128x32xf32>
    %8 = arith.addf %5, %7 : vector<128x32xf32>
    %cst_7 = arith.constant 0.000000e+00 : f32
    %9 = vector.broadcast %cst_7 : f32 to vector<128x32xf32>
    %10 = arith.maximumf %8, %9 : vector<128x32xf32>
    %c0_8 = arith.constant 0 : index
    %c0_9 = arith.constant 0 : index
    %11 = vector.load %arg5[%c0_8, %c0_9] : memref<32x32xf32, #tpu.memory_space<vmem>>, vector<32x32xf32>
    %cst_10 = arith.constant dense<0.000000e+00> : vector<128x32xf32>
    %12 = tpu.matmul %10, %11, %cst_10 {dimension_numbers = #tpu.dot_dimension_numbers<[1], [1], [0], [0], [0, 0, 1, 0], [], []>} : vector<128x32xf32>, vector<32x32xf32>, vector<128x32xf32> -> vector<128x32xf32>
    %c0_11 = arith.constant 0 : index
    %c0_12 = arith.constant 0 : index
    %13 = vector.load %arg6[%c0_11, %c0_12] : memref<1x32xf32, #tpu.memory_space<vmem>>, vector<1x32xf32>
    %14 = vector.broadcast %13 : vector<1x32xf32> to vector<128x32xf32>
    %15 = arith.addf %12, %14 : vector<128x32xf32>
    %cst_13 = arith.constant 0.000000e+00 : f32
    %16 = vector.broadcast %cst_13 : f32 to vector<128x32xf32>
    %17 = arith.maximumf %15, %16 : vector<128x32xf32>
    %c0_14 = arith.constant 0 : index
    %c0_15 = arith.constant 0 : index
    %18 = vector.load %arg7[%c0_14, %c0_15] : memref<16x32xf32, #tpu.memory_space<vmem>>, vector<16x32xf32>
    %cst_16 = arith.constant dense<0.000000e+00> : vector<128x16xf32>
    %19 = tpu.matmul %17, %18, %cst_16 {dimension_numbers = #tpu.dot_dimension_numbers<[1], [1], [0], [0], [0, 0, 1, 0], [], []>} : vector<128x32xf32>, vector<16x32xf32>, vector<128x16xf32> -> vector<128x16xf32>
    %c0_17 = arith.constant 0 : index
    %c0_18 = arith.constant 0 : index
    %20 = vector.load %arg8[%c0_17, %c0_18] : memref<1x16xf32, #tpu.memory_space<vmem>>, vector<1x16xf32>
    %21 = vector.broadcast %20 : vector<1x16xf32> to vector<128x16xf32>
    %22 = arith.addf %19, %21 : vector<128x16xf32>
    %cst_19 = arith.constant dense<0xFF800000> : vector<128xf32>
    %23 = vector.multi_reduction <maximumf>, %22, %cst_19 [1] : vector<128x16xf32> to vector<128xf32>
    %24 = vector.shape_cast %23 : vector<128xf32> to vector<128x1xf32>
    %25 = vector.broadcast %24 : vector<128x1xf32> to vector<128x16xf32>
    %26 = arith.subf %22, %25 : vector<128x16xf32>
    %27 = math.exp %26 : vector<128x16xf32>
    %cst_20 = arith.constant dense<0.000000e+00> : vector<128xf32>
    %28 = vector.multi_reduction <add>, %27, %cst_20 [1] : vector<128x16xf32> to vector<128xf32>
    %29 = vector.shape_cast %28 : vector<128xf32> to vector<128x1xf32>
    %30 = tpu.reciprocal %29 {approx = true} : vector<128x1xf32> -> vector<128x1xf32>
    %31 = vector.broadcast %30 : vector<128x1xf32> to vector<128x16xf32>
    %32 = arith.mulf %27, %31 : vector<128x16xf32>
    %c0_21 = arith.constant 0 : index
    %c0_22 = arith.constant 0 : index
    %33 = vector.load %arg9[%c0_21, %c0_22] : memref<128x16xf32, #tpu.memory_space<vmem>>, vector<128x16xf32>
    tpu.vector_store %arg9[%c0_21, %c0_22], %32 {strides = array<i32>} : memref<128x16xf32, #tpu.memory_space<vmem>>, vector<128x16xf32>,
    return
  }
  func.func @transform_0(%arg0: i32) -> (i32, i32) {
    %c0_i32 = arith.constant 0 : i32
    %c0_i32_0 = arith.constant 0 : i32
    return %arg0, %c0_i32 : i32, i32
  }
  func.func @transform_1(%arg0: i32) -> (i32, i32) {
    %c0_i32 = arith.constant 0 : i32
    %c0_i32_0 = arith.constant 0 : i32
    %c0_i32_1 = arith.constant 0 : i32
    return %c0_i32, %c0_i32_0 : i32, i32
  }
  func.func @transform_2(%arg0: i32) -> (i32, i32) {
    %c0_i32 = arith.constant 0 : i32
    %c0_i32_0 = arith.constant 0 : i32
    %c0_i32_1 = arith.constant 0 : i32
    return %c0_i32, %c0_i32_0 : i32, i32
  }
  func.func @transform_3(%arg0: i32) -> (i32, i32) {
    %c0_i32 = arith.constant 0 : i32
    %c0_i32_0 = arith.constant 0 : i32
    %c0_i32_1 = arith.constant 0 : i32
    return %c0_i32, %c0_i32_0 : i32, i32
  }
  func.func @transform_4(%arg0: i32) -> (i32, i32) {
    %c0_i32 = arith.constant 0 : i32
    %c0_i32_0 = arith.constant 0 : i32
    %c0_i32_1 = arith.constant 0 : i32
    return %c0_i32, %c0_i32_0 : i32, i32
  }
  func.func @transform_5(%arg0: i32) -> (i32, i32) {
    %c0_i32 = arith.constant 0 : i32
    %c0_i32_0 = arith.constant 0 : i32
    %c0_i32_1 = arith.constant 0 : i32
    return %c0_i32, %c0_i32_0 : i32, i32
  }
  func.func @transform_6(%arg0: i32) -> (i32, i32) {
    %c0_i32 = arith.constant 0 : i32
    %c0_i32_0 = arith.constant 0 : i32
    %c0_i32_1 = arith.constant 0 : i32
    return %c0_i32, %c0_i32_0 : i32, i32
  }
  func.func @transform_7(%arg0: i32) -> (i32, i32) {
    %c0_i32 = arith.constant 0 : i32
    %c0_i32_0 = arith.constant 0 : i32
    %c0_i32_1 = arith.constant 0 : i32
    return %c0_i32, %c0_i32_0 : i32, i32
  }
  func.func @transform_8(%arg0: i32) -> (i32, i32) {
    %c0_i32 = arith.constant 0 : i32
    %c0_i32_0 = arith.constant 0 : i32
    return %arg0, %c0_i32 : i32, i32
  }
}

</mosaic_0001>

<llo_original>
// kernel: tpu_custom_call.1
$region0: #{tpu_custom_call.1}
  #allocation0 [shape = 'u32[]', space=smem, size = 0x4, offset = 0x4, fixed_abs, tag = 'smem constant byte address 0x4 - core index']
  #allocation1 [shape = 'u32[144,128]{1,0:T(1,128)}', space=vmem, size = 0x12000, scoped, tag = 'internal scratch']
  %s0 = inlined_call_operand.vmem [shape: f32[512,32], index: 0, kind: input, shape index: {}]
  %s1 = inlined_call_operand.vmem [shape: f32[1,32], index: 1, kind: input, shape index: {}]
  %s2 = inlined_call_operand.vmem [shape: f32[32,32], index: 2, kind: input, shape index: {}]
  %s3 = inlined_call_operand.vmem [shape: f32[1,32], index: 3, kind: input, shape index: {}]
  %s4 = inlined_call_operand.vmem [shape: f32[32,32], index: 4, kind: input, shape index: {}]
  %s5 = inlined_call_operand.vmem [shape: f32[1,32], index: 5, kind: input, shape index: {}]
  %s6 = inlined_call_operand.vmem [shape: f32[16,32], index: 6, kind: input, shape index: {}]
  %s7 = inlined_call_operand.vmem [shape: f32[1,16], index: 7, kind: input, shape index: {}]
  %s8 = inlined_call_operand.vmem [shape: f32[512,16], index: 8, kind: output, shape index: {}]
  %s9 = sld [smem:[#allocation0]]
  $region65: #{tpu_custom_call.1} parent=0
    _
  %s11 = ssub.s32 1, %s9
  %s12 = scalar_select 0, %s11, %s9
  loop: start=0, step=1, limit=6
  $region2: #{tpu_custom_call.1} parent=0 // loop_pre_header
    _
  $region3: #{tpu_custom_call.1} parent=0 // loop_header
    %s14 = sphi 0, %s18
    %p15 = scmp.ge.s32.totalorder %s14, 6
    %s24 = sphi 0, %s26
    %s27 = sphi 0, %s24
    %s28 = sphi 0, %s27
    %s44 = sphi 0, %s28
    %s48 = sphi 0, %s48
    %s50 = sphi 0, %s48
    %s51 = sphi 0, %s50
    %s65 = sphi 0, %s51
    %s69 = sphi 0, %s69
    %s71 = sphi 0, %s69
    %s72 = sphi 0, %s71
    %s86 = sphi 0, %s72
    %s90 = sphi 0, %s90
    %s92 = sphi 0, %s90
    %s93 = sphi 0, %s92
    %s107 = sphi 0, %s93
    %s111 = sphi 0, %s111
    %s113 = sphi 0, %s111
    %s114 = sphi 0, %s113
    %s128 = sphi 0, %s114
    %s132 = sphi 0, %s132
    %s134 = sphi 0, %s132
    %s135 = sphi 0, %s134
    %s149 = sphi 0, %s135
    %s153 = sphi 0, %s153
    %s155 = sphi 0, %s153
    %s156 = sphi 0, %s155
    %s170 = sphi 0, %s156
    %s174 = sphi 0, %s174
    %s176 = sphi 0, %s174
    %s177 = sphi 0, %s176
    %s191 = sphi 0, %s177
    %s197 = sphi 0, %s199
    %s200 = sphi 0, %s197
    %s201 = sphi 0, %s200
    %s217 = sphi 0, %s201
  $region4: #{tpu_custom_call.1} parent=0 // loop_header_branch
    %17 = sbr.rel (%p15) target = $region8
  $region5: #{tpu_custom_call.1} parent=0 // loop_body
    %s19 = ssub.s32 %s14, 1
    %s20 = ssub.s32 %s14, 2
    %s21 = sadd.s32 %s14, 1
    %s22 = ssub.s32 %s14, %s21
    %p23 = scmp.eq.s32.totalorder %s22, 0
    %s25 = sadd.s32 %s24, 1
    %s26 = scalar_select %p23, %s24, %s25
    %p29 = pneg %p23
    %p30 = scmp.eq.s32.totalorder %s14, 3
    %p31 = por %p29, %p30
    %p32 = scmp.ne.s32.totalorder %s24, %s27
    %p33 = scmp.eq.s32.totalorder %s14, 0
    %p34 = por %p32, %p33
    %p35 = scmp.ne.s32.totalorder %s24, %s27
    %p36 = scmp.eq.s32.totalorder %s19, 3
    %p37 = por %p35, %p36
    %p38 = scmp.ne.s32.totalorder %s27, %s28
    %p39 = scmp.eq.s32.totalorder %s19, 0
    %p40 = por %p38, %p39
    %p41 = scmp.ne.s32.totalorder %s27, %s28
    %p42 = scmp.eq.s32.totalorder %s20, 3
    %p43 = por %p41, %p42
    %p45 = scmp.ne.s32.totalorder %s28, %s44
    %p46 = scmp.eq.s32.totalorder %s20, 0
    %p47 = por %p45, %p46
    %s49 = sadd.s32 %s48, 1
    %p52 = scmp.eq.s32.totalorder %s14, 3
    %p53 = scmp.ne.s32.totalorder %s48, %s50
    %p54 = scmp.eq.s32.totalorder %s14, 0
    %p55 = por %p53, %p54
    %p56 = scmp.ne.s32.totalorder %s48, %s50
    %p57 = scmp.eq.s32.totalorder %s19, 3
    %p58 = por %p56, %p57
    %p59 = scmp.ne.s32.totalorder %s50, %s51
    %p60 = scmp.eq.s32.totalorder %s19, 0
    %p61 = por %p59, %p60
    %p62 = scmp.ne.s32.totalorder %s50, %s51
    %p63 = scmp.eq.s32.totalorder %s20, 3
    %p64 = por %p62, %p63
    %p66 = scmp.ne.s32.totalorder %s51, %s65
    %p67 = scmp.eq.s32.totalorder %s20, 0
    %p68 = por %p66, %p67
    %s70 = sadd.s32 %s69, 1
    %p73 = scmp.eq.s32.totalorder %s14, 3
    %p74 = scmp.ne.s32.totalorder %s69, %s71
    %p75 = scmp.eq.s32.totalorder %s14, 0
    %p76 = por %p74, %p75
    %p77 = scmp.ne.s32.totalorder %s69, %s71
    %p78 = scmp.eq.s32.totalorder %s19, 3
    %p79 = por %p77, %p78
    %p80 = scmp.ne.s32.totalorder %s71, %s72
    %p81 = scmp.eq.s32.totalorder %s19, 0
    %p82 = por %p80, %p81
    %p83 = scmp.ne.s32.totalorder %s71, %s72
    %p84 = scmp.eq.s32.totalorder %s20, 3
    %p85 = por %p83, %p84
    %p87 = scmp.ne.s32.totalorder %s72, %s86
    %p88 = scmp.eq.s32.totalorder %s20, 0
    %p89 = por %p87, %p88
    %s91 = sadd.s32 %s90, 1
    %p94 = scmp.eq.s32.totalorder %s14, 3
    %p95 = scmp.ne.s32.totalorder %s90, %s92
    %p96 = scmp.eq.s32.totalorder %s14, 0
    %p97 = por %p95, %p96
    %p98 = scmp.ne.s32.totalorder %s90, %s92
    %p99 = scmp.eq.s32.totalorder %s19, 3
    %p100 = por %p98, %p99
    %p101 = scmp.ne.s32.totalorder %s92, %s93
    %p102 = scmp.eq.s32.totalorder %s19, 0
    %p103 = por %p101, %p102
    %p104 = scmp.ne.s32.totalorder %s92, %s93
    %p105 = scmp.eq.s32.totalorder %s20, 3
    %p106 = por %p104, %p105
    %p108 = scmp.ne.s32.totalorder %s93, %s107
    %p109 = scmp.eq.s32.totalorder %s20, 0
    %p110 = por %p108, %p109
    %s112 = sadd.s32 %s111, 1
    %p115 = scmp.eq.s32.totalorder %s14, 3
    %p116 = scmp.ne.s32.totalorder %s111, %s113
    %p117 = scmp.eq.s32.totalorder %s14, 0
    %p118 = por %p116, %p117
    %p119 = scmp.ne.s32.totalorder %s111, %s113
    %p120 = scmp.eq.s32.totalorder %s19, 3
    %p121 = por %p119, %p120
    %p122 = scmp.ne.s32.totalorder %s113, %s114
    %p123 = scmp.eq.s32.totalorder %s19, 0
    %p124 = por %p122, %p123
    %p125 = scmp.ne.s32.totalorder %s113, %s114
    %p126 = scmp.eq.s32.totalorder %s20, 3
    %p127 = por %p125, %p126
    %p129 = scmp.ne.s32.totalorder %s114, %s128
    %p130 = scmp.eq.s32.totalorder %s20, 0
    %p131 = por %p129, %p130
    %s133 = sadd.s32 %s132, 1
    %p136 = scmp.eq.s32.totalorder %s14, 3
    %p137 = scmp.ne.s32.totalorder %s132, %s134
    %p138 = scmp.eq.s32.totalorder %s14, 0
    %p139 = por %p137, %p138
    %p140 = scmp.ne.s32.totalorder %s132, %s134
    %p141 = scmp.eq.s32.totalorder %s19, 3
    %p142 = por %p140, %p141
    %p143 = scmp.ne.s32.totalorder %s134, %s135
    %p144 = scmp.eq.s32.totalorder %s19, 0
    %p145 = por %p143, %p144
    %p146 = scmp.ne.s32.totalorder %s134, %s135
    %p147 = scmp.eq.s32.totalorder %s20, 3
    %p148 = por %p146, %p147
    %p150 = scmp.ne.s32.totalorder %s135, %s149
    %p151 = scmp.eq.s32.totalorder %s20, 0
    %p152 = por %p150, %p151
    %s154 = sadd.s32 %s153, 1
    %p157 = scmp.eq.s32.totalorder %s14, 3
    %p158 = scmp.ne.s32.totalorder %s153, %s155
    %p159 = scmp.eq.s32.totalorder %s14, 0
    %p160 = por %p158, %p159
    %p161 = scmp.ne.s32.totalorder %s153, %s155
    %p162 = scmp.eq.s32.totalorder %s19, 3
    %p163 = por %p161, %p162
    %p164 = scmp.ne.s32.totalorder %s155, %s156
    %p165 = scmp.eq.s32.totalorder %s19, 0
    %p166 = por %p164, %p165
    %p167 = scmp.ne.s32.totalorder %s155, %s156
    %p168 = scmp.eq.s32.totalorder %s20, 3
    %p169 = por %p167, %p168
    %p171 = scmp.ne.s32.totalorder %s156, %s170
    %p172 = scmp.eq.s32.totalorder %s20, 0
    %p173 = por %p171, %p172
    %s175 = sadd.s32 %s174, 1
    %p178 = scmp.eq.s32.totalorder %s14, 3
    %p179 = scmp.ne.s32.totalorder %s174, %s176
    %p180 = scmp.eq.s32.totalorder %s14, 0
    %p181 = por %p179, %p180
    %p182 = scmp.ne.s32.totalorder %s174, %s176
    %p183 = scmp.eq.s32.totalorder %s19, 3
    %p184 = por %p182, %p183
    %p185 = scmp.ne.s32.totalorder %s176, %s177
    %p186 = scmp.eq.s32.totalorder %s19, 0
    %p187 = por %p185, %p186
    %p188 = scmp.ne.s32.totalorder %s176, %s177
    %p189 = scmp.eq.s32.totalorder %s20, 3
    %p190 = por %p188, %p189
    %p192 = scmp.ne.s32.totalorder %s177, %s191
    %p193 = scmp.eq.s32.totalorder %s20, 0
    %p194 = por %p192, %p193
    %s195 = ssub.s32 %s14, %s21
    %p196 = scmp.eq.s32.totalorder %s195, 0
    %s198 = sadd.s32 %s197, 1
    %s199 = scalar_select %p196, %s197, %s198
    %p202 = pneg %p196
    %p203 = scmp.eq.s32.totalorder %s14, 3
    %p204 = por %p202, %p203
    %p205 = scmp.ne.s32.totalorder %s197, %s200
    %p206 = scmp.eq.s32.totalorder %s14, 0
    %p207 = por %p205, %p206
    %p208 = scmp.ne.s32.totalorder %s197, %s200
    %p209 = scmp.eq.s32.totalorder %s19, 3
    %p210 = por %p208, %p209
    %p211 = scmp.ne.s32.totalorder %s200, %s201
    %p212 = scmp.eq.s32.totalorder %s19, 0
    %p213 = por %p211, %p212
    %p214 = scmp.ne.s32.totalorder %s200, %s201
    %p215 = scmp.eq.s32.totalorder %s20, 3
    %p216 = por %p214, %p215
    %p218 = scmp.ne.s32.totalorder %s201, %s217
    %p219 = scmp.eq.s32.totalorder %s20, 0
    %p220 = por %p218, %p219
    %p221 = scmp.le.s32.totalorder 1, %s14
    %p222 = scmp.lt.s32.totalorder %s14, 5
    %p223 = pnand %p221, %p222
    %p224 = pneg %p223
    // Predicated region
    $region9: #{tpu_custom_call.1} parent=5 // pred_check
      _
    $region10: #{tpu_custom_call.1} parent=5 // pred_check_branch
      %226 = sbr.rel (%p223) target = $region12
    $region11: #{tpu_custom_call.1} parent=5 // pred_region
      %s227 = ssub.s32 %s14, 1
      // Predicated region
      $region13: #{tpu_custom_call.1} parent=11 // pred_check
        %p228 = pneg %p61
      $region14: #{tpu_custom_call.1} parent=11 // pred_check_branch
        %230 = sbr.rel (%p228) target = $region16
      $region15: #{tpu_custom_call.1} parent=11 // pred_region
        _
      $region16: #{tpu_custom_call.1} parent=11 // pred_fallthru
        _
      // Predicated region
      $region17: #{tpu_custom_call.1} parent=11 // pred_check
        %p231 = pneg %p82
      $region18: #{tpu_custom_call.1} parent=11 // pred_check_branch
        %233 = sbr.rel (%p231) target = $region20
      $region19: #{tpu_custom_call.1} parent=11 // pred_region
        _
      $region20: #{tpu_custom_call.1} parent=11 // pred_fallthru
        _
      // Predicated region
      $region21: #{tpu_custom_call.1} parent=11 // pred_check
        %p234 = pneg %p103
      $region22: #{tpu_custom_call.1} parent=11 // pred_check_branch
        %236 = sbr.rel (%p234) target = $region24
      $region23: #{tpu_custom_call.1} parent=11 // pred_region
        _
      $region24: #{tpu_custom_call.1} parent=11 // pred_fallthru
        _
      // Predicated region
      $region25: #{tpu_custom_call.1} parent=11 // pred_check
        %p237 = pneg %p124
      $region26: #{tpu_custom_call.1} parent=11 // pred_check_branch
        %239 = sbr.rel (%p237) target = $region28
      $region27: #{tpu_custom_call.1} parent=11 // pred_region
        _
      $region28: #{tpu_custom_call.1} parent=11 // pred_fallthru
        _
      // Predicated region
      $region29: #{tpu_custom_call.1} parent=11 // pred_check
        %p240 = pneg %p145
      $region30: #{tpu_custom_call.1} parent=11 // pred_check_branch
        %242 = sbr.rel (%p240) target = $region32
      $region31: #{tpu_custom_call.1} parent=11 // pred_region
        _
      $region32: #{tpu_custom_call.1} parent=11 // pred_fallthru
        _
      // Predicated region
      $region33: #{tpu_custom_call.1} parent=11 // pred_check
        %p243 = pneg %p166
      $region34: #{tpu_custom_call.1} parent=11 // pred_check_branch
        %245 = sbr.rel (%p243) target = $region36
      $region35: #{tpu_custom_call.1} parent=11 // pred_region
        _
      $region36: #{tpu_custom_call.1} parent=11 // pred_fallthru
        _
      // Predicated region
      $region37: #{tpu_custom_call.1} parent=11 // pred_check
        %p246 = pneg %p187
      $region38: #{tpu_custom_call.1} parent=11 // pred_check_branch
        %248 = sbr.rel (%p246) target = $region40
      $region39: #{tpu_custom_call.1} parent=11 // pred_region
        _
      $region40: #{tpu_custom_call.1} parent=11 // pred_fallthru
        _
    $region12: #{tpu_custom_call.1} parent=5 // pred_fallthru
      _
    %p249 = scmp.lt.s32.totalorder %s14, 4
    // Predicated region
    $region41: #{tpu_custom_call.1} parent=5 // pred_check
      %p250 = pneg %p249
    $region42: #{tpu_custom_call.1} parent=5 // pred_check_branch
      %252 = sbr.rel (%p250) target = $region44
    $region43: #{tpu_custom_call.1} parent=5 // pred_region
      // Predicated region
      $region45: #{tpu_custom_call.1} parent=43 // pred_check
        %p253 = pneg %p34
      $region46: #{tpu_custom_call.1} parent=43 // pred_check_branch
        %255 = sbr.rel (%p253) target = $region48
      $region47: #{tpu_custom_call.1} parent=43 // pred_region
        %s256 = smul.u32 16, %s14
        %p257 = scmp.lt.s32.totalorder %s256, 63
        %s258 = scalar_select %p257, %s256, 63
        %s259 = smul.addr %s258, 8
        %s260 = scalar_lea.vmem %s0, %s259
        %s261 = smul.u32 16, %s14
      $region48: #{tpu_custom_call.1} parent=43 // pred_fallthru
        _
    $region44: #{tpu_custom_call.1} parent=5 // pred_fallthru
      _
    %p262 = scmp.le.s32.totalorder 1, %s14
    %p263 = scmp.lt.s32.totalorder %s14, 5
    %p264 = pnand %p262, %p263
    %p265 = pneg %p264
    // Predicated region
    $region49: #{tpu_custom_call.1} parent=5 // pred_check
      _
    $region50: #{tpu_custom_call.1} parent=5 // pred_check_branch
      %267 = sbr.rel (%p264) target = $region52
    $region51: #{tpu_custom_call.1} parent=5 // pred_region
      %s268 = ssub.s32 %s14, 1
      %s269 = smul.u32 16, %s19
      %p270 = scmp.lt.s32.totalorder %s269, 63
      %s271 = scalar_select %p270, %s269, 63
      %s272 = smul.addr %s271, 8
      %s273 = scalar_lea.vmem %s0, %s272
      %p274 = pneg %p40
      %p275 = pneg %p37
      %p276 = pneg %p61
      %p277 = pneg %p58
      %p278 = pneg %p82
      %p279 = pneg %p79
      %p280 = pneg %p103
      %p281 = pneg %p100
      %p282 = pneg %p124
      %p283 = pneg %p121
      %p284 = pneg %p145
      %p285 = pneg %p142
      %p286 = pneg %p166
      %p287 = pneg %p163
      %p288 = pneg %p187
      %p289 = pneg %p184
      %p290 = pneg %p213
      %p291 = pneg %p210
      %s292 = smul.u32 16, %s19
      %p293 = scmp.lt.s32.totalorder %s292, 63
      %s294 = scalar_select %p293, %s292, 63
      %s295 = smul.addr %s294, 8
      %s296 = scalar_lea.vmem %s8, %s295
      %s297 = smul.u32 16, %s19
      %p298 = scmp.lt.s32.totalorder %s297, 63
      %s299 = scalar_select %p298, %s297, 63
      %s300 = smul.addr %s299, 8
      %s301 = scalar_lea.vmem %s0, %s300
      %s302 = smul.u32 16, %s19
      %s303 = smul.u32 16, %s19
      %p304 = scmp.lt.s32.totalorder %s303, 63
      %s305 = scalar_select %p304, %s303, 63
      %s306 = smul.addr %s305, 8
      %s307 = scalar_lea.vmem %s8, %s306
      %s308 = smul.u32 16, %s19
      %v309 = vld [vmem:[%s301] sm:$0xff]
      %v310 = vld [vmem:[%s301 + $0x8] sm:$0xff]
      %v311 = vld [vmem:[%s301 + $0x10] sm:$0xff]
      %v312 = vld [vmem:[%s301 + $0x18] sm:$0xff]
      %v313 = vld [vmem:[%s301 + $0x20] sm:$0xff]
      %v314 = vld [vmem:[%s301 + $0x28] sm:$0xff]
      %v315 = vld [vmem:[%s301 + $0x30] sm:$0xff]
      %v316 = vld [vmem:[%s301 + $0x38] sm:$0xff]
      %v317 = vld [vmem:[%s301 + $0x40] sm:$0xff]
      %v318 = vld [vmem:[%s301 + $0x48] sm:$0xff]
      %v319 = vld [vmem:[%s301 + $0x50] sm:$0xff]
      %v320 = vld [vmem:[%s301 + $0x58] sm:$0xff]
      %v321 = vld [vmem:[%s301 + $0x60] sm:$0xff]
      %v322 = vld [vmem:[%s301 + $0x68] sm:$0xff]
      %v323 = vld [vmem:[%s301 + $0x70] sm:$0xff]
      %v324 = vld [vmem:[%s301 + $0x78] sm:$0xff]
      %v325 = vld [vmem:[%s1] sm:$0x1]
      %v327 = vlaneseq
      %v328 = vshrl.u32 %v327, 7
      %v329 = vsub.s32 0, %v328
      %v330 = vrot.slane %v325, %v329
      %v332 = vmul.f32 %v309, %v330
      %v333 = vmul.f32 %v310, %v330
      %v334 = vmul.f32 %v311, %v330
      %v335 = vmul.f32 %v312, %v330
      %v336 = vmul.f32 %v313, %v330
      %v337 = vmul.f32 %v314, %v330
      %v338 = vmul.f32 %v315, %v330
      %v339 = vmul.f32 %v316, %v330
      %v340 = vmul.f32 %v317, %v330
      %v341 = vmul.f32 %v318, %v330
      %v342 = vmul.f32 %v319, %v330
      %v343 = vmul.f32 %v320, %v330
      %v344 = vmul.f32 %v321, %v330
      %v345 = vmul.f32 %v322, %v330
      %v346 = vmul.f32 %v323, %v330
      %v347 = vmul.f32 %v324, %v330
      %v348 = vld [vmem:[%s2] sm:$0xff]
      %v349 = vld [vmem:[%s2 + $0x8] sm:$0xff]
      %v350 = vld [vmem:[%s2 + $0x10] sm:$0xff]
      %v351 = vld [vmem:[%s2 + $0x18] sm:$0xff]
      %v352 = vld [vmem:[%s3] sm:$0x1]
      %v354 = vlaneseq
      %v355 = vshrl.u32 %v354, 7
      %v356 = vsub.s32 0, %v355
      %v357 = vrot.slane %v352, %v356
      %vm359 = vcmask 261120
      %v361 = vsel %vm359, %v332, 0
      %v364 = vsel %vm359, %v333, 0
      %v367 = vsel %vm359, %v334, 0
      %v370 = vsel %vm359, %v335, 0
      %v373 = vsel %vm359, %v336, 0
      %v376 = vsel %vm359, %v337, 0
      %v379 = vsel %vm359, %v338, 0
      %v382 = vsel %vm359, %v339, 0
      %v385 = vsel %vm359, %v340, 0
      %v388 = vsel %vm359, %v341, 0
      %v391 = vsel %vm359, %v342, 0
      %v394 = vsel %vm359, %v343, 0
      %v397 = vsel %vm359, %v344, 0
      %v400 = vsel %vm359, %v345, 0
      %v403 = vsel %vm359, %v346, 0
      %v406 = vsel %vm359, %v347, 0
      %v409 = vsel %vm359, %v348, 0
      %v412 = vsel %vm359, %v349, 0
      %v415 = vsel %vm359, %v350, 0
      %v418 = vsel %vm359, %v351, 0
      %420 = vmatprep.subr.mxu0 0.0
      %421 = vmatpush1.xpose.msra.mxu0 0.0
      %422 = vmatprep.subr.mxu0 0.0
      %423 = vmatpush1.xpose.msra.mxu0 0.0
      %424 = vmatprep.subr.mxu0 0.0
      %425 = vmatpush1.xpose.msra.mxu0 0.0
      %426 = vmatprep.subr.mxu0 0.0
      %427 = vmatpush1.xpose.msra.mxu0 0.0
      %428 = vmatprep.subr.mxu0 0.0
      %429 = vmatpush1.xpose.msra.mxu0 0.0
      %430 = vmatprep.subr.mxu0 0.0
      %431 = vmatpush1.xpose.msra.mxu0 0.0
      %432 = vmatprep.subr.mxu0 0.0
      %433 = vmatpush1.xpose.msra.mxu0 0.0
      %434 = vmatprep.subr.mxu0 0.0
      %435 = vmatpush1.xpose.msra.mxu0 0.0
      %436 = vmatprep.subr.mxu0 0.0
      %437 = vmatpush1.xpose.msra.mxu0 0.0
      %438 = vmatprep.subr.mxu0 0.0
      %439 = vmatpush1.xpose.msra.mxu0 0.0
      %440 = vmatprep.subr.mxu0 0.0
      %441 = vmatpush1.xpose.msra.mxu0 0.0
      %442 = vmatprep.subr.mxu0 0.0
      %443 = vmatpush1.xpose.msra.mxu0 0.0
      %444 = vmatprep.subr.mxu0 0.0
      %445 = vmatpush1.xpose.msra.mxu0 %v418
      %446 = vmatprep.subr.mxu0 0.0
      %447 = vmatpush1.xpose.msra.mxu0 %v415
      %448 = vmatprep.subr.mxu0 0.0
      %449 = vmatpush1.xpose.msra.mxu0 %v412
      %450 = vmatprep.subr.mxu0 0.0
      %451 = vmatpush1.xpose.msra.mxu0 %v409
      %452 = vmatprep.subr.mxu0 0.0
      %453 = vmatpush2.xpose.msra.mxu0 0.0
      %454 = vmatprep.subr.mxu0 0.0
      %455 = vmatpush2.xpose.msra.mxu0 0.0
      %456 = vmatprep.subr.mxu0 0.0
      %457 = vmatpush2.xpose.msra.mxu0 0.0
      %458 = vmatprep.subr.mxu0 0.0
      %459 = vmatpush2.xpose.msra.mxu0 0.0
      %460 = vmatprep.subr.mxu0 0.0
      %461 = vmatpush2.xpose.msra.mxu0 0.0
      %462 = vmatprep.subr.mxu0 0.0
      %463 = vmatpush2.xpose.msra.mxu0 0.0
      %464 = vmatprep.subr.mxu0 0.0
      %465 = vmatpush2.xpose.msra.mxu0 0.0
      %466 = vmatprep.subr.mxu0 0.0
      %467 = vmatpush2.xpose.msra.mxu0 0.0
      %468 = vmatprep.subr.mxu0 0.0
      %469 = vmatpush2.xpose.msra.mxu0 0.0
      %470 = vmatprep.subr.mxu0 0.0
      %471 = vmatpush2.xpose.msra.mxu0 0.0
      %472 = vmatprep.subr.mxu0 0.0
      %473 = vmatpush2.xpose.msra.mxu0 0.0
      %474 = vmatprep.subr.mxu0 0.0
      %475 = vmatpush2.xpose.msra.mxu0 0.0
      %476 = vmatprep.subr.mxu0 0.0
      %477 = vmatpush2.xpose.msra.mxu0 0.0
      %478 = vmatprep.subr.mxu0 0.0
      %479 = vmatpush2.xpose.msra.mxu0 0.0
      %480 = vmatprep.subr.mxu0 0.0
      %481 = vmatpush2.xpose.msra.mxu0 0.0
      %482 = vmatprep.subr.mxu0 0.0
      %483 = vmatpush2.xpose.msra.mxu0 0.0
      %484 = vmatprep.mubr.f32.mxu0 0.0
      %485 = vmatmul.mubr.f32.gmra.mxu0 %v361
      %v486 = vpop.f32.mrf.mxu0
      %v487 = vadd.f32 %v357, %v486
      %v488 = vpop.f32.mrf.mxu0
      %489 = vmatprep.mubr.f32.mxu0 0.0
      %490 = vmatmul.mubr.f32.gmra.mxu0 %v364
      %v491 = vpop.f32.mrf.mxu0
      %v492 = vadd.f32 %v357, %v491
      %v493 = vpop.f32.mrf.mxu0
      %494 = vmatprep.mubr.f32.mxu0 0.0
      %495 = vmatmul.mubr.f32.gmra.mxu0 %v367
      %v496 = vpop.f32.mrf.mxu0
      %v497 = vadd.f32 %v357, %v496
      %v498 = vpop.f32.mrf.mxu0
      %499 = vmatprep.mubr.f32.mxu0 0.0
      %500 = vmatmul.mubr.f32.gmra.mxu0 %v370
      %v501 = vpop.f32.mrf.mxu0
      %v502 = vadd.f32 %v357, %v501
      %v503 = vpop.f32.mrf.mxu0
      %504 = vmatprep.mubr.f32.mxu0 0.0
      %505 = vmatmul.mubr.f32.gmra.mxu0 %v373
      %v506 = vpop.f32.mrf.mxu0
      %v507 = vadd.f32 %v357, %v506
      %v508 = vpop.f32.mrf.mxu0
      %509 = vmatprep.mubr.f32.mxu0 0.0
      %510 = vmatmul.mubr.f32.gmra.mxu0 %v376
      %v511 = vpop.f32.mrf.mxu0
      %v512 = vadd.f32 %v357, %v511
      %v513 = vpop.f32.mrf.mxu0
      %514 = vmatprep.mubr.f32.mxu0 0.0
      %515 = vmatmul.mubr.f32.gmra.mxu0 %v379
      %v516 = vpop.f32.mrf.mxu0
      %v517 = vadd.f32 %v357, %v516
      %v518 = vpop.f32.mrf.mxu0
      %519 = vmatprep.mubr.f32.mxu0 0.0
      %520 = vmatmul.mubr.f32.gmra.mxu0 %v382
      %v521 = vpop.f32.mrf.mxu0
      %v522 = vadd.f32 %v357, %v521
      %v523 = vpop.f32.mrf.mxu0
      %524 = vmatprep.mubr.f32.mxu0 0.0
      %525 = vmatmul.mubr.f32.gmra.mxu0 %v385
      %v526 = vpop.f32.mrf.mxu0
      %v527 = vadd.f32 %v357, %v526
      %v528 = vpop.f32.mrf.mxu0
      %529 = vmatprep.mubr.f32.mxu0 0.0
      %530 = vmatmul.mubr.f32.gmra.mxu0 %v388
      %v531 = vpop.f32.mrf.mxu0
      %v532 = vadd.f32 %v357, %v531
      %v533 = vpop.f32.mrf.mxu0
      %534 = vmatprep.mubr.f32.mxu0 0.0
      %535 = vmatmul.mubr.f32.gmra.mxu0 %v391
      %v536 = vpop.f32.mrf.mxu0
      %v537 = vadd.f32 %v357, %v536
      %v538 = vpop.f32.mrf.mxu0
      %539 = vmatprep.mubr.f32.mxu0 0.0
      %540 = vmatmul.mubr.f32.gmra.mxu0 %v394
      %v541 = vpop.f32.mrf.mxu0
      %v542 = vadd.f32 %v357, %v541
      %v543 = vpop.f32.mrf.mxu0
      %544 = vmatprep.mubr.f32.mxu0 0.0
      %545 = vmatmul.mubr.f32.gmra.mxu0 %v397
      %v546 = vpop.f32.mrf.mxu0
      %v547 = vadd.f32 %v357, %v546
      %v548 = vpop.f32.mrf.mxu0
      %549 = vmatprep.mubr.f32.mxu0 0.0
      %550 = vmatmul.mubr.f32.gmra.mxu0 %v400
      %v551 = vpop.f32.mrf.mxu0
      %v552 = vadd.f32 %v357, %v551
      %v553 = vpop.f32.mrf.mxu0
      %554 = vmatprep.mubr.f32.mxu0 0.0
      %555 = vmatmul.mubr.f32.gmra.mxu0 %v403
      %v556 = vpop.f32.mrf.mxu0
      %v557 = vadd.f32 %v357, %v556
      %v558 = vpop.f32.mrf.mxu0
      %559 = vmatprep.mubr.f32.mxu0 0.0
      %560 = vmatmul.mubr.f32.gmra.mxu0 %v406
      %v561 = vpop.f32.mrf.mxu0
      %v562 = vadd.f32 %v357, %v561
      %v563 = vpop.f32.mrf.mxu0
      %564 = vdwg.mxu0
      %v565 = vmax.f32 %v487, 0.0
      %v566 = vmax.f32 %v492, 0.0
      %v567 = vmax.f32 %v497, 0.0
      %v568 = vmax.f32 %v502, 0.0
      %v569 = vmax.f32 %v507, 0.0
      %v570 = vmax.f32 %v512, 0.0
      %v571 = vmax.f32 %v517, 0.0
      %v572 = vmax.f32 %v522, 0.0
      %v573 = vmax.f32 %v527, 0.0
      %v574 = vmax.f32 %v532, 0.0
      %v575 = vmax.f32 %v537, 0.0
      %v576 = vmax.f32 %v542, 0.0
      %v577 = vmax.f32 %v547, 0.0
      %v578 = vmax.f32 %v552, 0.0
      %v579 = vmax.f32 %v557, 0.0
      %v580 = vmax.f32 %v562, 0.0
      %v581 = vld [vmem:[%s4] sm:$0xff]
      %v582 = vld [vmem:[%s4 + $0x8] sm:$0xff]
      %v583 = vld [vmem:[%s4 + $0x10] sm:$0xff]
      %v584 = vld [vmem:[%s4 + $0x18] sm:$0xff]
      %v585 = vld [vmem:[%s5] sm:$0x1]
      %v587 = vlaneseq
      %v588 = vshrl.u32 %v587, 7
      %v589 = vsub.s32 0, %v588
      %v590 = vrot.slane %v585, %v589
      %v593 = vsel %vm359, %v565, 0
      %v596 = vsel %vm359, %v566, 0
      %v599 = vsel %vm359, %v567, 0
      %v602 = vsel %vm359, %v568, 0
      %v605 = vsel %vm359, %v569, 0
      %v608 = vsel %vm359, %v570, 0
      %v611 = vsel %vm359, %v571, 0
      %v614 = vsel %vm359, %v572, 0
      %v617 = vsel %vm359, %v573, 0
      %v620 = vsel %vm359, %v574, 0
      %v623 = vsel %vm359, %v575, 0
      %v626 = vsel %vm359, %v576, 0
      %v629 = vsel %vm359, %v577, 0
      %v632 = vsel %vm359, %v578, 0
      %v635 = vsel %vm359, %v579, 0
      %v638 = vsel %vm359, %v580, 0
      %v641 = vsel %vm359, %v581, 0
      %v644 = vsel %vm359, %v582, 0
      %v647 = vsel %vm359, %v583, 0
      %v650 = vsel %vm359, %v584, 0
      %652 = vmatprep.subr.mxu0 0.0
      %653 = vmatpush1.xpose.msra.mxu0 0.0
      %654 = vmatprep.subr.mxu0 0.0
      %655 = vmatpush1.xpose.msra.mxu0 0.0
      %656 = vmatprep.subr.mxu0 0.0
      %657 = vmatpush1.xpose.msra.mxu0 0.0
      %658 = vmatprep.subr.mxu0 0.0
      %659 = vmatpush1.xpose.msra.mxu0 0.0
      %660 = vmatprep.subr.mxu0 0.0
      %661 = vmatpush1.xpose.msra.mxu0 0.0
      %662 = vmatprep.subr.mxu0 0.0
      %663 = vmatpush1.xpose.msra.mxu0 0.0
      %664 = vmatprep.subr.mxu0 0.0
      %665 = vmatpush1.xpose.msra.mxu0 0.0
      %666 = vmatprep.subr.mxu0 0.0
      %667 = vmatpush1.xpose.msra.mxu0 0.0
      %668 = vmatprep.subr.mxu0 0.0
      %669 = vmatpush1.xpose.msra.mxu0 0.0
      %670 = vmatprep.subr.mxu0 0.0
      %671 = vmatpush1.xpose.msra.mxu0 0.0
      %672 = vmatprep.subr.mxu0 0.0
      %673 = vmatpush1.xpose.msra.mxu0 0.0
      %674 = vmatprep.subr.mxu0 0.0
      %675 = vmatpush1.xpose.msra.mxu0 0.0
      %676 = vmatprep.subr.mxu0 0.0
      %677 = vmatpush1.xpose.msra.mxu0 %v650
      %678 = vmatprep.subr.mxu0 0.0
      %679 = vmatpush1.xpose.msra.mxu0 %v647
      %680 = vmatprep.subr.mxu0 0.0
      %681 = vmatpush1.xpose.msra.mxu0 %v644
      %682 = vmatprep.subr.mxu0 0.0
      %683 = vmatpush1.xpose.msra.mxu0 %v641
      %684 = vmatprep.subr.mxu0 0.0
      %685 = vmatpush2.xpose.msra.mxu0 0.0
      %686 = vmatprep.subr.mxu0 0.0
      %687 = vmatpush2.xpose.msra.mxu0 0.0
      %688 = vmatprep.subr.mxu0 0.0
      %689 = vmatpush2.xpose.msra.mxu0 0.0
      %690 = vmatprep.subr.mxu0 0.0
      %691 = vmatpush2.xpose.msra.mxu0 0.0
      %692 = vmatprep.subr.mxu0 0.0
      %693 = vmatpush2.xpose.msra.mxu0 0.0
      %694 = vmatprep.subr.mxu0 0.0
      %695 = vmatpush2.xpose.msra.mxu0 0.0
      %696 = vmatprep.subr.mxu0 0.0
      %697 = vmatpush2.xpose.msra.mxu0 0.0
      %698 = vmatprep.subr.mxu0 0.0
      %699 = vmatpush2.xpose.msra.mxu0 0.0
      %700 = vmatprep.subr.mxu0 0.0
      %701 = vmatpush2.xpose.msra.mxu0 0.0
      %702 = vmatprep.subr.mxu0 0.0
      %703 = vmatpush2.xpose.msra.mxu0 0.0
      %704 = vmatprep.subr.mxu0 0.0
      %705 = vmatpush2.xpose.msra.mxu0 0.0
      %706 = vmatprep.subr.mxu0 0.0
      %707 = vmatpush2.xpose.msra.mxu0 0.0
      %708 = vmatprep.subr.mxu0 0.0
      %709 = vmatpush2.xpose.msra.mxu0 0.0
      %710 = vmatprep.subr.mxu0 0.0
      %711 = vmatpush2.xpose.msra.mxu0 0.0
      %712 = vmatprep.subr.mxu0 0.0
      %713 = vmatpush2.xpose.msra.mxu0 0.0
      %714 = vmatprep.subr.mxu0 0.0
      %715 = vmatpush2.xpose.msra.mxu0 0.0
      %716 = vmatprep.mubr.f32.mxu0 0.0
      %717 = vmatmul.mubr.f32.gmra.mxu0 %v593
      %v718 = vpop.f32.mrf.mxu0
      %v719 = vadd.f32 %v590, %v718
      %v720 = vpop.f32.mrf.mxu0
      %721 = vmatprep.mubr.f32.mxu0 0.0
      %722 = vmatmul.mubr.f32.gmra.mxu0 %v596
      %v723 = vpop.f32.mrf.mxu0
      %v724 = vadd.f32 %v590, %v723
      %v725 = vpop.f32.mrf.mxu0
      %726 = vmatprep.mubr.f32.mxu0 0.0
      %727 = vmatmul.mubr.f32.gmra.mxu0 %v599
      %v728 = vpop.f32.mrf.mxu0
      %v729 = vadd.f32 %v590, %v728
      %v730 = vpop.f32.mrf.mxu0
      %731 = vmatprep.mubr.f32.mxu0 0.0
      %732 = vmatmul.mubr.f32.gmra.mxu0 %v602
      %v733 = vpop.f32.mrf.mxu0
      %v734 = vadd.f32 %v590, %v733
      %v735 = vpop.f32.mrf.mxu0
      %736 = vmatprep.mubr.f32.mxu0 0.0
      %737 = vmatmul.mubr.f32.gmra.mxu0 %v605
      %v738 = vpop.f32.mrf.mxu0
      %v739 = vadd.f32 %v590, %v738
      %v740 = vpop.f32.mrf.mxu0
      %741 = vmatprep.mubr.f32.mxu0 0.0
      %742 = vmatmul.mubr.f32.gmra.mxu0 %v608
      %v743 = vpop.f32.mrf.mxu0
      %v744 = vadd.f32 %v590, %v743
      %v745 = vpop.f32.mrf.mxu0
      %746 = vmatprep.mubr.f32.mxu0 0.0
      %747 = vmatmul.mubr.f32.gmra.mxu0 %v611
      %v748 = vpop.f32.mrf.mxu0
      %v749 = vadd.f32 %v590, %v748
      %v750 = vpop.f32.mrf.mxu0
      %751 = vmatprep.mubr.f32.mxu0 0.0
      %752 = vmatmul.mubr.f32.gmra.mxu0 %v614
      %v753 = vpop.f32.mrf.mxu0
      %v754 = vadd.f32 %v590, %v753
      %v755 = vpop.f32.mrf.mxu0
      %756 = vmatprep.mubr.f32.mxu0 0.0
      %757 = vmatmul.mubr.f32.gmra.mxu0 %v617
      %v758 = vpop.f32.mrf.mxu0
      %v759 = vadd.f32 %v590, %v758
      %v760 = vpop.f32.mrf.mxu0
      %761 = vmatprep.mubr.f32.mxu0 0.0
      %762 = vmatmul.mubr.f32.gmra.mxu0 %v620
      %v763 = vpop.f32.mrf.mxu0
      %v764 = vadd.f32 %v590, %v763
      %v765 = vpop.f32.mrf.mxu0
      %766 = vmatprep.mubr.f32.mxu0 0.0
      %767 = vmatmul.mubr.f32.gmra.mxu0 %v623
      %v768 = vpop.f32.mrf.mxu0
      %v769 = vadd.f32 %v590, %v768
      %v770 = vpop.f32.mrf.mxu0
      %771 = vmatprep.mubr.f32.mxu0 0.0
      %772 = vmatmul.mubr.f32.gmra.mxu0 %v626
      %v773 = vpop.f32.mrf.mxu0
      %v774 = vadd.f32 %v590, %v773
      %v775 = vpop.f32.mrf.mxu0
      %776 = vmatprep.mubr.f32.mxu0 0.0
      %777 = vmatmul.mubr.f32.gmra.mxu0 %v629
      %v778 = vpop.f32.mrf.mxu0
      %v779 = vadd.f32 %v590, %v778
      %v780 = vpop.f32.mrf.mxu0
      %781 = vmatprep.mubr.f32.mxu0 0.0
      %782 = vmatmul.mubr.f32.gmra.mxu0 %v632
      %v783 = vpop.f32.mrf.mxu0
      %v784 = vadd.f32 %v590, %v783
      %v785 = vpop.f32.mrf.mxu0
      %786 = vmatprep.mubr.f32.mxu0 0.0
      %787 = vmatmul.mubr.f32.gmra.mxu0 %v635
      %v788 = vpop.f32.mrf.mxu0
      %v789 = vadd.f32 %v590, %v788
      %v790 = vpop.f32.mrf.mxu0
      %791 = vmatprep.mubr.f32.mxu0 0.0
      %792 = vmatmul.mubr.f32.gmra.mxu0 %v638
      %v793 = vpop.f32.mrf.mxu0
      %v794 = vadd.f32 %v590, %v793
      %v795 = vpop.f32.mrf.mxu0
      %796 = vdwg.mxu0
      %v797 = vmax.f32 %v719, 0.0
      %v798 = vmax.f32 %v724, 0.0
      %v799 = vmax.f32 %v729, 0.0
      %v800 = vmax.f32 %v734, 0.0
      %v801 = vmax.f32 %v739, 0.0
      %v802 = vmax.f32 %v744, 0.0
      %v803 = vmax.f32 %v749, 0.0
      %v804 = vmax.f32 %v754, 0.0
      %v805 = vmax.f32 %v759, 0.0
      %v806 = vmax.f32 %v764, 0.0
      %v807 = vmax.f32 %v769, 0.0
      %v808 = vmax.f32 %v774, 0.0
      %v809 = vmax.f32 %v779, 0.0
      %v810 = vmax.f32 %v784, 0.0
      %v811 = vmax.f32 %v789, 0.0
      %v812 = vmax.f32 %v794, 0.0
      %v813 = vld [vmem:[%s6] sm:$0xff]
      %v814 = vld [vmem:[%s6 + $0x8] sm:$0xff]
      %v815 = vld [vmem:[%s7] sm:$0x1]
      %v817 = vlaneseq
      %v818 = vshrl.u32 %v817, 7
      %v819 = vsub.s32 0, %v818
      %v820 = vrot.slane %v815, %v819
      %v823 = vsel %vm359, %v797, 0
      %v826 = vsel %vm359, %v798, 0
      %v829 = vsel %vm359, %v799, 0
      %v832 = vsel %vm359, %v800, 0
      %v835 = vsel %vm359, %v801, 0
      %v838 = vsel %vm359, %v802, 0
      %v841 = vsel %vm359, %v803, 0
      %v844 = vsel %vm359, %v804, 0
      %v847 = vsel %vm359, %v805, 0
      %v850 = vsel %vm359, %v806, 0
      %v853 = vsel %vm359, %v807, 0
      %v856 = vsel %vm359, %v808, 0
      %v859 = vsel %vm359, %v809, 0
      %v862 = vsel %vm359, %v810, 0
      %v865 = vsel %vm359, %v811, 0
      %v868 = vsel %vm359, %v812, 0
      %v871 = vsel %vm359, %v813, 0
      %v874 = vsel %vm359, %v814, 0
      %876 = vmatprep.subr.mxu0 0.0
      %877 = vmatpush1.xpose.msra.mxu0 0.0
      %878 = vmatprep.subr.mxu0 0.0
      %879 = vmatpush1.xpose.msra.mxu0 0.0
      %880 = vmatprep.subr.mxu0 0.0
      %881 = vmatpush1.xpose.msra.mxu0 0.0
      %882 = vmatprep.subr.mxu0 0.0
      %883 = vmatpush1.xpose.msra.mxu0 0.0
      %884 = vmatprep.subr.mxu0 0.0
      %885 = vmatpush1.xpose.msra.mxu0 0.0
      %886 = vmatprep.subr.mxu0 0.0
      %887 = vmatpush1.xpose.msra.mxu0 0.0
      %888 = vmatprep.subr.mxu0 0.0
      %889 = vmatpush1.xpose.msra.mxu0 0.0
      %890 = vmatprep.subr.mxu0 0.0
      %891 = vmatpush1.xpose.msra.mxu0 0.0
      %892 = vmatprep.subr.mxu0 0.0
      %893 = vmatpush1.xpose.msra.mxu0 0.0
      %894 = vmatprep.subr.mxu0 0.0
      %895 = vmatpush1.xpose.msra.mxu0 0.0
      %896 = vmatprep.subr.mxu0 0.0
      %897 = vmatpush1.xpose.msra.mxu0 0.0
      %898 = vmatprep.subr.mxu0 0.0
      %899 = vmatpush1.xpose.msra.mxu0 0.0
      %900 = vmatprep.subr.mxu0 0.0
      %901 = vmatpush1.xpose.msra.mxu0 0.0
      %902 = vmatprep.subr.mxu0 0.0
      %903 = vmatpush1.xpose.msra.mxu0 0.0
      %904 = vmatprep.subr.mxu0 0.0
      %905 = vmatpush1.xpose.msra.mxu0 %v874
      %906 = vmatprep.subr.mxu0 0.0
      %907 = vmatpush1.xpose.msra.mxu0 %v871
      %908 = vmatprep.subr.mxu0 0.0
      %909 = vmatpush2.xpose.msra.mxu0 0.0
      %910 = vmatprep.subr.mxu0 0.0
      %911 = vmatpush2.xpose.msra.mxu0 0.0
      %912 = vmatprep.subr.mxu0 0.0
      %913 = vmatpush2.xpose.msra.mxu0 0.0
      %914 = vmatprep.subr.mxu0 0.0
      %915 = vmatpush2.xpose.msra.mxu0 0.0
      %916 = vmatprep.subr.mxu0 0.0
      %917 = vmatpush2.xpose.msra.mxu0 0.0
      %918 = vmatprep.subr.mxu0 0.0
      %919 = vmatpush2.xpose.msra.mxu0 0.0
      %920 = vmatprep.subr.mxu0 0.0
      %921 = vmatpush2.xpose.msra.mxu0 0.0
      %922 = vmatprep.subr.mxu0 0.0
      %923 = vmatpush2.xpose.msra.mxu0 0.0
      %924 = vmatprep.subr.mxu0 0.0
      %925 = vmatpush2.xpose.msra.mxu0 0.0
      %926 = vmatprep.subr.mxu0 0.0
      %927 = vmatpush2.xpose.msra.mxu0 0.0
      %928 = vmatprep.subr.mxu0 0.0
      %929 = vmatpush2.xpose.msra.mxu0 0.0
      %930 = vmatprep.subr.mxu0 0.0
      %931 = vmatpush2.xpose.msra.mxu0 0.0
      %932 = vmatprep.subr.mxu0 0.0
      %933 = vmatpush2.xpose.msra.mxu0 0.0
      %934 = vmatprep.subr.mxu0 0.0
      %935 = vmatpush2.xpose.msra.mxu0 0.0
      %936 = vmatprep.subr.mxu0 0.0
      %937 = vmatpush2.xpose.msra.mxu0 0.0
      %938 = vmatprep.subr.mxu0 0.0
      %939 = vmatpush2.xpose.msra.mxu0 0.0
      %940 = vmatprep.mubr.f32.mxu0 0.0
      %941 = vmatmul.mubr.f32.gmra.mxu0 %v823
      %v942 = vpop.f32.mrf.mxu0
      %v943 = vadd.f32 %v820, %v942
      %v944 = vpop.f32.mrf.mxu0
      %945 = vmatprep.mubr.f32.mxu0 0.0
      %946 = vmatmul.mubr.f32.gmra.mxu0 %v826
      %v947 = vpop.f32.mrf.mxu0
      %v948 = vadd.f32 %v820, %v947
      %v949 = vpop.f32.mrf.mxu0
      %950 = vmatprep.mubr.f32.mxu0 0.0
      %951 = vmatmul.mubr.f32.gmra.mxu0 %v829
      %v952 = vpop.f32.mrf.mxu0
      %v953 = vadd.f32 %v820, %v952
      %v954 = vpop.f32.mrf.mxu0
      %955 = vmatprep.mubr.f32.mxu0 0.0
      %956 = vmatmul.mubr.f32.gmra.mxu0 %v832
      %v957 = vpop.f32.mrf.mxu0
      %v958 = vadd.f32 %v820, %v957
      %v959 = vpop.f32.mrf.mxu0
      %960 = vmatprep.mubr.f32.mxu0 0.0
      %961 = vmatmul.mubr.f32.gmra.mxu0 %v835
      %v962 = vpop.f32.mrf.mxu0
      %v963 = vadd.f32 %v820, %v962
      %v964 = vpop.f32.mrf.mxu0
      %965 = vmatprep.mubr.f32.mxu0 0.0
      %966 = vmatmul.mubr.f32.gmra.mxu0 %v838
      %v967 = vpop.f32.mrf.mxu0
      %v968 = vadd.f32 %v820, %v967
      %v969 = vpop.f32.mrf.mxu0
      %970 = vmatprep.mubr.f32.mxu0 0.0
      %971 = vmatmul.mubr.f32.gmra.mxu0 %v841
      %v972 = vpop.f32.mrf.mxu0
      %v973 = vadd.f32 %v820, %v972
      %v974 = vpop.f32.mrf.mxu0
      %975 = vmatprep.mubr.f32.mxu0 0.0
      %976 = vmatmul.mubr.f32.gmra.mxu0 %v844
      %v977 = vpop.f32.mrf.mxu0
      %v978 = vadd.f32 %v820, %v977
      %v979 = vpop.f32.mrf.mxu0
      %980 = vmatprep.mubr.f32.mxu0 0.0
      %981 = vmatmul.mubr.f32.gmra.mxu0 %v847
      %v982 = vpop.f32.mrf.mxu0
      %v983 = vadd.f32 %v820, %v982
      %v984 = vpop.f32.mrf.mxu0
      %985 = vmatprep.mubr.f32.mxu0 0.0
      %986 = vmatmul.mubr.f32.gmra.mxu0 %v850
      %v987 = vpop.f32.mrf.mxu0
      %v988 = vadd.f32 %v820, %v987
      %v989 = vpop.f32.mrf.mxu0
      %990 = vmatprep.mubr.f32.mxu0 0.0
      %991 = vmatmul.mubr.f32.gmra.mxu0 %v853
      %v992 = vpop.f32.mrf.mxu0
      %v993 = vadd.f32 %v820, %v992
      %v994 = vpop.f32.mrf.mxu0
      %995 = vmatprep.mubr.f32.mxu0 0.0
      %996 = vmatmul.mubr.f32.gmra.mxu0 %v856
      %v997 = vpop.f32.mrf.mxu0
      %v998 = vadd.f32 %v820, %v997
      %v999 = vpop.f32.mrf.mxu0
      %1000 = vmatprep.mubr.f32.mxu0 0.0
      %1001 = vmatmul.mubr.f32.gmra.mxu0 %v859
      %v1002 = vpop.f32.mrf.mxu0
      %v1003 = vadd.f32 %v820, %v1002
      %v1004 = vpop.f32.mrf.mxu0
      %1005 = vmatprep.mubr.f32.mxu0 0.0
      %1006 = vmatmul.mubr.f32.gmra.mxu0 %v862
      %v1007 = vpop.f32.mrf.mxu0
      %v1008 = vadd.f32 %v820, %v1007
      %v1009 = vpop.f32.mrf.mxu0
      %1010 = vmatprep.mubr.f32.mxu0 0.0
      %1011 = vmatmul.mubr.f32.gmra.mxu0 %v865
      %v1012 = vpop.f32.mrf.mxu0
      %v1013 = vadd.f32 %v820, %v1012
      %v1014 = vpop.f32.mrf.mxu0
      %1015 = vmatprep.mubr.f32.mxu0 0.0
      %1016 = vmatmul.mubr.f32.gmra.mxu0 %v868
      %v1017 = vpop.f32.mrf.mxu0
      %v1018 = vadd.f32 %v820, %v1017
      %v1019 = vpop.f32.mrf.mxu0
      %1020 = vdwg.mxu0
      %vm1021 = vcmask 130048
      %v1022 = vsel %vm1021, %v943, -inf
      %1023 = vmax.xlane.f32.xlu0 %v1022
      %v1024 = vpop.xlane.xlu0 %1023
      %v1025 = vsel %vm1021, %v948, -inf
      %1026 = vmax.xlane.f32.xlu0 %v1025
      %v1027 = vpop.xlane.xlu0 %1026
      %v1028 = vsel %vm1021, %v953, -inf
      %1029 = vmax.xlane.f32.xlu0 %v1028
      %v1030 = vpop.xlane.xlu0 %1029
      %v1031 = vsel %vm1021, %v958, -inf
      %1032 = vmax.xlane.f32.xlu0 %v1031
      %v1033 = vpop.xlane.xlu0 %1032
      %v1034 = vsel %vm1021, %v963, -inf
      %1035 = vmax.xlane.f32.xlu0 %v1034
      %v1036 = vpop.xlane.xlu0 %1035
      %v1037 = vsel %vm1021, %v968, -inf
      %1038 = vmax.xlane.f32.xlu0 %v1037
      %v1039 = vpop.xlane.xlu0 %1038
      %v1040 = vsel %vm1021, %v973, -inf
      %1041 = vmax.xlane.f32.xlu0 %v1040
      %v1042 = vpop.xlane.xlu0 %1041
      %v1043 = vsel %vm1021, %v978, -inf
      %1044 = vmax.xlane.f32.xlu0 %v1043
      %v1045 = vpop.xlane.xlu0 %1044
      %v1046 = vsel %vm1021, %v983, -inf
      %1047 = vmax.xlane.f32.xlu0 %v1046
      %v1048 = vpop.xlane.xlu0 %1047
      %v1049 = vsel %vm1021, %v988, -inf
      %1050 = vmax.xlane.f32.xlu0 %v1049
      %v1051 = vpop.xlane.xlu0 %1050
      %v1052 = vsel %vm1021, %v993, -inf
      %1053 = vmax.xlane.f32.xlu0 %v1052
      %v1054 = vpop.xlane.xlu0 %1053
      %v1055 = vsel %vm1021, %v998, -inf
      %1056 = vmax.xlane.f32.xlu0 %v1055
      %v1057 = vpop.xlane.xlu0 %1056
      %v1058 = vsel %vm1021, %v1003, -inf
      %1059 = vmax.xlane.f32.xlu0 %v1058
      %v1060 = vpop.xlane.xlu0 %1059
      %v1061 = vsel %vm1021, %v1008, -inf
      %1062 = vmax.xlane.f32.xlu0 %v1061
      %v1063 = vpop.xlane.xlu0 %1062
      %v1064 = vsel %vm1021, %v1013, -inf
      %1065 = vmax.xlane.f32.xlu0 %v1064
      %v1066 = vpop.xlane.xlu0 %1065
      %v1067 = vsel %vm1021, %v1018, -inf
      %1068 = vmax.xlane.f32.xlu0 %v1067
      %v1069 = vpop.xlane.xlu0 %1068
      %v1070 = vsub.f32 %v943, %v1024
      %v1071 = vsub.f32 %v948, %v1027
      %v1072 = vsub.f32 %v953, %v1030
      %v1073 = vsub.f32 %v958, %v1033
      %v1074 = vsub.f32 %v963, %v1036
      %v1075 = vsub.f32 %v968, %v1039
      %v1076 = vsub.f32 %v973, %v1042
      %v1077 = vsub.f32 %v978, %v1045
      %v1078 = vsub.f32 %v983, %v1048
      %v1079 = vsub.f32 %v988, %v1051
      %v1080 = vsub.f32 %v993, %v1054
      %v1081 = vsub.f32 %v998, %v1057
      %v1082 = vsub.f32 %v1003, %v1060
      %v1083 = vsub.f32 %v1008, %v1063
      %v1084 = vsub.f32 %v1013, %v1066
      %v1085 = vsub.f32 %v1018, %v1069
      %v1086 = vmul.f32 %v1070, 1.442695
      %v1087 = vpow.pop %v1086
      %v1088 = vmul.f32 %v1071, 1.442695
      %v1089 = vpow.pop %v1088
      %v1090 = vmul.f32 %v1072, 1.442695
      %v1091 = vpow.pop %v1090
      %v1092 = vmul.f32 %v1073, 1.442695
      %v1093 = vpow.pop %v1092
      %v1094 = vmul.f32 %v1074, 1.442695
      %v1095 = vpow.pop %v1094
      %v1096 = vmul.f32 %v1075, 1.442695
      %v1097 = vpow.pop %v1096
      %v1098 = vmul.f32 %v1076, 1.442695
      %v1099 = vpow.pop %v1098
      %v1100 = vmul.f32 %v1077, 1.442695
      %v1101 = vpow.pop %v1100
      %v1102 = vmul.f32 %v1078, 1.442695
      %v1103 = vpow.pop %v1102
      %v1104 = vmul.f32 %v1079, 1.442695
      %v1105 = vpow.pop %v1104
      %v1106 = vmul.f32 %v1080, 1.442695
      %v1107 = vpow.pop %v1106
      %v1108 = vmul.f32 %v1081, 1.442695
      %v1109 = vpow.pop %v1108
      %v1110 = vmul.f32 %v1082, 1.442695
      %v1111 = vpow.pop %v1110
      %v1112 = vmul.f32 %v1083, 1.442695
      %v1113 = vpow.pop %v1112
      %v1114 = vmul.f32 %v1084, 1.442695
      %v1115 = vpow.pop %v1114
      %v1116 = vmul.f32 %v1085, 1.442695
      %v1117 = vpow.pop %v1116
      %v1118 = vsel %vm1021, %v1087, 0.0
      %1119 = vadd.xlane.f32.xlu0 %v1118
      %v1120 = vpop.xlane.xlu0 %1119
      %v1121 = vsel %vm1021, %v1089, 0.0
      %1122 = vadd.xlane.f32.xlu0 %v1121
      %v1123 = vpop.xlane.xlu0 %1122
      %v1124 = vsel %vm1021, %v1091, 0.0
      %1125 = vadd.xlane.f32.xlu0 %v1124
      %v1126 = vpop.xlane.xlu0 %1125
      %v1127 = vsel %vm1021, %v1093, 0.0
      %1128 = vadd.xlane.f32.xlu0 %v1127
      %v1129 = vpop.xlane.xlu0 %1128
      %v1130 = vsel %vm1021, %v1095, 0.0
      %1131 = vadd.xlane.f32.xlu0 %v1130
      %v1132 = vpop.xlane.xlu0 %1131
      %v1133 = vsel %vm1021, %v1097, 0.0
      %1134 = vadd.xlane.f32.xlu0 %v1133
      %v1135 = vpop.xlane.xlu0 %1134
      %v1136 = vsel %vm1021, %v1099, 0.0
      %1137 = vadd.xlane.f32.xlu0 %v1136
      %v1138 = vpop.xlane.xlu0 %1137
      %v1139 = vsel %vm1021, %v1101, 0.0
      %1140 = vadd.xlane.f32.xlu0 %v1139
      %v1141 = vpop.xlane.xlu0 %1140
      %v1142 = vsel %vm1021, %v1103, 0.0
      %1143 = vadd.xlane.f32.xlu0 %v1142
      %v1144 = vpop.xlane.xlu0 %1143
      %v1145 = vsel %vm1021, %v1105, 0.0
      %1146 = vadd.xlane.f32.xlu0 %v1145
      %v1147 = vpop.xlane.xlu0 %1146
      %v1148 = vsel %vm1021, %v1107, 0.0
      %1149 = vadd.xlane.f32.xlu0 %v1148
      %v1150 = vpop.xlane.xlu0 %1149
      %v1151 = vsel %vm1021, %v1109, 0.0
      %1152 = vadd.xlane.f32.xlu0 %v1151
      %v1153 = vpop.xlane.xlu0 %1152
      %v1154 = vsel %vm1021, %v1111, 0.0
      %1155 = vadd.xlane.f32.xlu0 %v1154
      %v1156 = vpop.xlane.xlu0 %1155
      %v1157 = vsel %vm1021, %v1113, 0.0
      %1158 = vadd.xlane.f32.xlu0 %v1157
      %v1159 = vpop.xlane.xlu0 %1158
      %v1160 = vsel %vm1021, %v1115, 0.0
      %1161 = vadd.xlane.f32.xlu0 %v1160
      %v1162 = vpop.xlane.xlu0 %1161
      %v1163 = vsel %vm1021, %v1117, 0.0
      %1164 = vadd.xlane.f32.xlu0 %v1163
      %v1165 = vpop.xlane.xlu0 %1164
      %v1166 = vrcp.pop %v1120
      %v1167 = vrcp.pop %v1123
      %v1168 = vrcp.pop %v1126
      %v1169 = vrcp.pop %v1129
      %v1170 = vrcp.pop %v1132
      %v1171 = vrcp.pop %v1135
      %v1172 = vrcp.pop %v1138
      %v1173 = vrcp.pop %v1141
      %v1174 = vrcp.pop %v1144
      %v1175 = vrcp.pop %v1147
      %v1176 = vrcp.pop %v1150
      %v1177 = vrcp.pop %v1153
      %v1178 = vrcp.pop %v1156
      %v1179 = vrcp.pop %v1159
      %v1180 = vrcp.pop %v1162
      %v1181 = vrcp.pop %v1165
      %v1182 = vmul.f32 %v1087, %v1166
      %v1183 = vmul.f32 %v1089, %v1167
      %v1184 = vmul.f32 %v1091, %v1168
      %v1185 = vmul.f32 %v1093, %v1169
      %v1186 = vmul.f32 %v1095, %v1170
      %v1187 = vmul.f32 %v1097, %v1171
      %v1188 = vmul.f32 %v1099, %v1172
      %v1189 = vmul.f32 %v1101, %v1173
      %v1190 = vmul.f32 %v1103, %v1174
      %v1191 = vmul.f32 %v1105, %v1175
      %v1192 = vmul.f32 %v1107, %v1176
      %v1193 = vmul.f32 %v1109, %v1177
      %v1194 = vmul.f32 %v1111, %v1178
      %v1195 = vmul.f32 %v1113, %v1179
      %v1196 = vmul.f32 %v1115, %v1180
      %v1197 = vmul.f32 %v1117, %v1181
      %1198 = vst.msk [vmem:[%s307] sm:$0xff] %vm1021, %v1182
      %1199 = vst.msk [vmem:[%s307 + $0x8] sm:$0xff] %vm1021, %v1183
      %1200 = vst.msk [vmem:[%s307 + $0x10] sm:$0xff] %vm1021, %v1184
      %1201 = vst.msk [vmem:[%s307 + $0x18] sm:$0xff] %vm1021, %v1185
      %1202 = vst.msk [vmem:[%s307 + $0x20] sm:$0xff] %vm1021, %v1186
      %1203 = vst.msk [vmem:[%s307 + $0x28] sm:$0xff] %vm1021, %v1187
      %1204 = vst.msk [vmem:[%s307 + $0x30] sm:$0xff] %vm1021, %v1188
      %1205 = vst.msk [vmem:[%s307 + $0x38] sm:$0xff] %vm1021, %v1189
      %1206 = vst.msk [vmem:[%s307 + $0x40] sm:$0xff] %vm1021, %v1190
      %1207 = vst.msk [vmem:[%s307 + $0x48] sm:$0xff] %vm1021, %v1191
      %1208 = vst.msk [vmem:[%s307 + $0x50] sm:$0xff] %vm1021, %v1192
      %1209 = vst.msk [vmem:[%s307 + $0x58] sm:$0xff] %vm1021, %v1193
      %1210 = vst.msk [vmem:[%s307 + $0x60] sm:$0xff] %vm1021, %v1194
      %1211 = vst.msk [vmem:[%s307 + $0x68] sm:$0xff] %vm1021, %v1195
      %1212 = vst.msk [vmem:[%s307 + $0x70] sm:$0xff] %vm1021, %v1196
      %1213 = vst.msk [vmem:[%s307 + $0x78] sm:$0xff] %vm1021, %v1197
      %s1214 = smul.u32 16, %s19
      %p1215 = scmp.lt.s32.totalorder %s1214, 63
      %s1216 = scalar_select %p1215, %s1214, 63
      %s1217 = smul.addr %s1216, 8
      %s1218 = scalar_lea.vmem %s8, %s1217
      // Predicated region
      $region53: #{tpu_custom_call.1} parent=51 // pred_check
        %p1219 = pneg %p210
      $region54: #{tpu_custom_call.1} parent=51 // pred_check_branch
        %1221 = sbr.rel (%p1219) target = $region56
      $region55: #{tpu_custom_call.1} parent=51 // pred_region
        %s1222 = smul.u32 16, %s19
      $region56: #{tpu_custom_call.1} parent=51 // pred_fallthru
        _
    $region52: #{tpu_custom_call.1} parent=5 // pred_fallthru
      _
    %p1223 = scmp.le.s32.totalorder 2, %s14
    // Predicated region
    $region57: #{tpu_custom_call.1} parent=5 // pred_check
      %p1224 = pneg %p1223
    $region58: #{tpu_custom_call.1} parent=5 // pred_check_branch
      %1226 = sbr.rel (%p1224) target = $region60
    $region59: #{tpu_custom_call.1} parent=5 // pred_region
      %s1227 = ssub.s32 %s14, 2
      // Predicated region
      $region61: #{tpu_custom_call.1} parent=59 // pred_check
        %p1228 = pneg %p216
      $region62: #{tpu_custom_call.1} parent=59 // pred_check_branch
        %1230 = sbr.rel (%p1228) target = $region64
      $region63: #{tpu_custom_call.1} parent=59 // pred_region
        %s1231 = smul.u32 16, %s20
        %p1232 = scmp.lt.s32.totalorder %s1231, 63
        %s1233 = scalar_select %p1232, %s1231, 63
        %s1234 = smul.addr %s1233, 8
        %s1235 = scalar_lea.vmem %s8, %s1234
      $region64: #{tpu_custom_call.1} parent=59 // pred_fallthru
        _
    $region60: #{tpu_custom_call.1} parent=5 // pred_fallthru
      _
  $region6: #{tpu_custom_call.1} parent=0 // loop_footer
    %s18 = sadd.s32 1, %s14
  $region7: #{tpu_custom_call.1} parent=0 // loop_footer_branch
    %13 = sbr.rel target = $region3
  $region8: #{tpu_custom_call.1} parent=0 // loop_exit
    _

</llo_original>
